<compile_context>
chip_gen: v5e
topology: v5e:2x2
jax: 0.10.0
libtpu: 0.0.40
codegen_flags: <defaults>
</compile_context>

<pallas_src>
import functools

import numpy as np
import jax
import jax.numpy as jnp
from jax.experimental import pallas as pl
from jax.experimental.pallas import tpu as pltpu

LEAKY_SLOPE = 0.01      # PyTorch nn.LeakyReLU default negative_slope
LANE = 128              # vreg lane width
BATCH_ALIGN = 16        # bf16 sublane packing (16 rows / packed vreg)


def _round_up(x, m):
    return ((x + m - 1) // m) * m


def _vmem_limit_bytes():
    """Generation-aware scoped-VMEM budget with headroom for compiler scratch."""
    try:
        cap = int(pltpu.get_tpu_info().vmem_capacity_bytes)
    except Exception:
        cap = 64 * 1024 * 1024  # conservative floor (v7x per-TC VMEM)
    return int(max(min(cap - 12 * 1024 * 1024, 100 * 1024 * 1024),
                   32 * 1024 * 1024))


_VMEM_LIMIT = _vmem_limit_bytes()


# --------------------------------------------------------------------------- #
# Kernel
# --------------------------------------------------------------------------- #
def mlp_kernel(x_ref, w1_ref, b1_ref, w2_ref, b2_ref, w3_ref, b3_ref, o_ref):
    compute_dtype = w1_ref.dtype

    # fc1 + LeakyReLU  (bf16 MXU matmul, f32 accumulate / activation)
    h = jnp.dot(x_ref[...], w1_ref[...], preferred_element_type=jnp.float32)
    h = h + b1_ref[...]
    h = jnp.maximum(h, LEAKY_SLOPE * h)          # LeakyReLU (slope in (0,1))

    # fc2 + LeakyReLU
    h = jnp.dot(h.astype(compute_dtype), w2_ref[...],
                preferred_element_type=jnp.float32)
    h = h + b2_ref[...]
    h = jnp.maximum(h, LEAKY_SLOPE * h)

    # fc3 (no activation)
    h = jnp.dot(h.astype(compute_dtype), w3_ref[...],
                preferred_element_type=jnp.float32)
    h = h + b3_ref[...]

    o_ref[...] = h.astype(o_ref.dtype)


# --------------------------------------------------------------------------- #
# Parameter preparation (done ONCE, outside the per-call forward)
# --------------------------------------------------------------------------- #
def prepare_mlp_params(w1, b1, w2, b2, w3, b3, compute_dtype=jnp.bfloat16):
    """Pad feature dims to 128-lane multiples and cast weights to bf16 once.

    w*: [in, out]; b*: [out] or [1, out].
    Returns (padded_param_tuple, out_features).
    NOTE: bf16 weights/activations are an accuracy trade-off (f32 accumulate).
    """
    in_size, h1 = w1.shape
    h2 = w2.shape[1]
    out_size = w3.shape[1]
    in_p = _round_up(in_size, LANE)
    h1_p = _round_up(h1, LANE)
    h2_p = _round_up(h2, LANE)
    out_p = _round_up(out_size, LANE)

    def pad2(a, rows, cols, dtype):
        a = a.reshape(a.shape[-2] if a.ndim == 2 else 1, -1).astype(dtype)
        return jnp.pad(a, ((0, rows - a.shape[0]), (0, cols - a.shape[1])))

    w1_p = pad2(w1, in_p, h1_p, compute_dtype)
    w2_p = pad2(w2, h1_p, h2_p, compute_dtype)
    w3_p = pad2(w3, h2_p, out_p, compute_dtype)
    b1_p = pad2(b1, 1, h1_p, jnp.float32)
    b2_p = pad2(b2, 1, h2_p, jnp.float32)
    b3_p = pad2(b3, 1, out_p, jnp.float32)
    return (w1_p, b1_p, w2_p, b2_p, w3_p, b3_p), out_size


def _resident_spec(shape, single_buffer):
    """VMEM-resident block (constant index_map); single-buffered when possible."""
    index_map = lambda i: (0, 0)
    if single_buffer:
        return pl.BlockSpec(shape, index_map, pipeline_mode=pl.Buffered(1))
    return pl.BlockSpec(shape, index_map)


# --------------------------------------------------------------------------- #
# Forward pass (takes pre-padded / pre-cast params)
# --------------------------------------------------------------------------- #
@functools.partial(
    jax.jit,
    static_argnames=("out_size", "block_m", "single_buffer_weights"))
def mlp_forward_padded(x, w1_p, b1_p, w2_p, b2_p, w3_p, b3_p, *,
                       out_size, block_m=512, single_buffer_weights=True):
    """x: [B, in_features]; padded params from prepare_mlp_params()."""
    B, in_size = x.shape
    in_p, h1_p = w1_p.shape
    h2_p = w2_p.shape[1]
    out_p = w3_p.shape[1]
    out_dtype = x.dtype
    out_itemsize = np.dtype(out_dtype).itemsize
    compute_dtype = w1_p.dtype

    # ---- batch tile selection ------------------------------------------------
    block_m = max(BATCH_ALIGN, _round_up(block_m, BATCH_ALIGN))
    tm = min(block_m, _round_up(B, BATCH_ALIGN))
    if B >= 2 * BATCH_ALIGN:
        # Guarantee >= 2 batch tiles so both v7x TensorCores get work.
        tm = min(tm, _round_up((B + 1) // 2, BATCH_ALIGN))

    # Shrink tm if the estimated VMEM footprint would exceed the budget:
    #   single-buffered bf16 weights + f32 biases
    #   + double-buffered x / out tiles + f32 intermediates.
    weight_bytes = (in_p * h1_p + h1_p * h2_p + h2_p * out_p) * 2
    bias_bytes = (h1_p + h2_p + out_p) * 4

    def vmem_need(tm_):
        io_bytes = 2 * tm_ * (in_p * 2 + out_p * out_itemsize)
        inter_bytes = tm_ * (h1_p + h2_p) * 4
        return weight_bytes + bias_bytes + io_bytes + inter_bytes

    while vmem_need(tm) > _VMEM_LIMIT and tm > BATCH_ALIGN:
        tm = max(BATCH_ALIGN, _round_up(tm // 2, BATCH_ALIGN))
    # TODO(synk): if the bf16 weights alone exceed the VMEM budget (very large
    # hidden dims), switch to a K/N-tiled grid with an f32 VMEM accumulator
    # instead of keeping all three layers resident.

    B_p = _round_up(B, tm)
    x_p = jnp.pad(x.astype(compute_dtype), ((0, B_p - B), (0, in_p - in_size)))

    grid = (B_p // tm,)

    flops = 2 * B_p * (in_p * h1_p + h1_p * h2_p + h2_p * out_p)
    bytes_accessed = (B_p * in_p * 2 + B_p * out_p * out_itemsize
                      + weight_bytes + bias_bytes)

    out_padded = pl.pallas_call(
        mlp_kernel,
        out_shape=jax.ShapeDtypeStruct((B_p, out_p), out_dtype),
        grid=grid,
        in_specs=[
            pl.BlockSpec((tm, in_p), lambda i: (i, 0)),          # x: batch-tiled
            _resident_spec((in_p, h1_p), single_buffer_weights),  # W1
            _resident_spec((1, h1_p), single_buffer_weights),     # b1
            _resident_spec((h1_p, h2_p), single_buffer_weights),  # W2
            _resident_spec((1, h2_p), single_buffer_weights),     # b2
            _resident_spec((h2_p, out_p), single_buffer_weights),  # W3
            _resident_spec((1, out_p), single_buffer_weights),     # b3
        ],
        out_specs=pl.BlockSpec((tm, out_p), lambda i: (i, 0)),
        compiler_params=pltpu.CompilerParams(
            dimension_semantics=("parallel",),   # shard batch tiles over TCs
            vmem_limit_bytes=_VMEM_LIMIT,        # generation-aware budget
        ),
        cost_estimate=pl.CostEstimate(
            flops=int(flops), transcendentals=0,
            bytes_accessed=int(bytes_accessed)),
    )(x_p, w1_p, b1_p, w2_p, b2_p, w3_p, b3_p)

    return out_padded[:B, :out_size]


def mlp_forward(x, w1, b1, w2, b2, w3, b3, *, block_m=512):
    """Convenience one-shot API (pads/casts params on every call).
    For repeated inference, call prepare_mlp_params() once and use
    mlp_forward_padded() directly."""
    padded, out_size = prepare_mlp_params(w1, b1, w2, b2, w3, b3)
    return mlp_forward_padded(x, *padded, out_size=out_size, block_m=block_m)


# --------------------------------------------------------------------------- #
# Reference & demo
# --------------------------------------------------------------------------- #
def init_linear_params(key, in_features, out_features, dtype=jnp.float32):
    # Deterministic init mimicking PyTorch nn.Linear default:
    # U(-1/sqrt(in), 1/sqrt(in)) for both weight and bias.
    kw, kb = jax.random.split(key)
    bound = 1.0 / float(np.sqrt(in_features))
    # Stored as [in, out] so the kernel computes x @ W.
    w = jax.random.uniform(kw, (in_features, out_features), dtype,
                           minval=-bound, maxval=bound)
    b = jax.random.uniform(kb, (out_features,), dtype,
                           minval=-bound, maxval=bound)
    return w, b


def reference_forward(x, w1, b1, w2, b2, w3, b3):
    h = x @ w1 + b1
    h = jnp.where(h > 0, h, LEAKY_SLOPE * h)
    h = h @ w2 + b2
    h = jnp.where(h > 0, h, LEAKY_SLOPE * h)
    return h @ w3 + b3


if __name__ == "__main__":
    # Small shapes consistent with MLP(input_size, hidden1, hidden2, output_size)
    batch = 8
    input_size, hidden1, hidden2, output_size = 32, 64, 64, 16

    key = jax.random.PRNGKey(0)
    kx, k1, k2, k3 = jax.random.split(key, 4)

    x = jax.random.normal(kx, (batch, input_size), jnp.float32)
    w1, b1 = init_linear_params(k1, input_size, hidden1)
    w2, b2 = init_linear_params(k2, hidden1, hidden2)
    w3, b3 = init_linear_params(k3, hidden2, output_size)

    # Prepare (pad + bf16-cast) parameters ONCE.
    padded_params, out_size = prepare_mlp_params(w1, b1, w2, b2, w3, b3)

    try:
        out = jax.block_until_ready(
            mlp_forward_padded(x, *padded_params, out_size=out_size))
    except Exception:
        # Fallback for jax versions without single-buffer pipeline_mode support.
        out = jax.block_until_ready(
            mlp_forward_padded(x, *padded_params, out_size=out_size,
                               single_buffer_weights=False))

    ref = reference_forward(x, w1, b1, w2, b2, w3, b3)
    assert out.shape == (batch, output_size)
    # bf16 matmuls with f32 accumulation -> loosened tolerance vs f32 reference.
    assert jnp.allclose(out, ref, atol=5e-2, rtol=5e-2), (
        f"max abs err {jnp.max(jnp.abs(out - ref))}")

    print("KERNEL_OK")
</pallas_src>

<mosaic_0001>
module attributes {stable_mosaic.version = 11 : i64} {
  func.func @mlp_kernel(%arg0: i32, %arg1: memref<16x128xbf16, #tpu.memory_space<vmem>>, %arg2: memref<128x128xbf16, #tpu.memory_space<vmem>>, %arg3: memref<1x128xf32, #tpu.memory_space<vmem>>, %arg4: memref<128x128xbf16, #tpu.memory_space<vmem>>, %arg5: memref<1x128xf32, #tpu.memory_space<vmem>>, %arg6: memref<128x128xbf16, #tpu.memory_space<vmem>>, %arg7: memref<1x128xf32, #tpu.memory_space<vmem>>, %arg8: memref<16x128xf32, #tpu.memory_space<vmem>>) attributes {dimension_semantics = [#tpu.dimension_semantics<parallel>], iteration_bounds = array<i64: 1>, scalar_prefetch = 0 : i64, scratch_operands = 0 : i64, tpu.core_type = #tpu.core_type<tc>, window_params = [{transform_indices = @transform_0, window_bounds = array<i64: 16, 128>}, {pipeline_mode = #tpu.pipeline_mode<synchronous>, transform_indices = @transform_1, window_bounds = array<i64: 128, 128>}, {pipeline_mode = #tpu.pipeline_mode<synchronous>, transform_indices = @transform_2, window_bounds = array<i64: 1, 128>}, {pipeline_mode = #tpu.pipeline_mode<synchronous>, transform_indices = @transform_3, window_bounds = array<i64: 128, 128>}, {pipeline_mode = #tpu.pipeline_mode<synchronous>, transform_indices = @transform_4, window_bounds = array<i64: 1, 128>}, {pipeline_mode = #tpu.pipeline_mode<synchronous>, transform_indices = @transform_5, window_bounds = array<i64: 128, 128>}, {pipeline_mode = #tpu.pipeline_mode<synchronous>, transform_indices = @transform_6, window_bounds = array<i64: 1, 128>}, {transform_indices = @transform_7, window_bounds = array<i64: 16, 128>}]} {
    %c0 = arith.constant 0 : index
    %c0_0 = arith.constant 0 : index
    %0 = vector.load %arg1[%c0, %c0_0] : memref<16x128xbf16, #tpu.memory_space<vmem>>, vector<16x128xbf16>
    %c0_1 = arith.constant 0 : index
    %c0_2 = arith.constant 0 : index
    %1 = vector.load %arg2[%c0_1, %c0_2] : memref<128x128xbf16, #tpu.memory_space<vmem>>, vector<128x128xbf16>
    %cst = arith.constant dense<0.000000e+00> : vector<16x128xf32>
    %2 = tpu.matmul %0, %1, %cst {dimension_numbers = #tpu.dot_dimension_numbers<[1], [0], [0], [1], [0, 0, 1, 1], [], []>} : vector<16x128xbf16>, vector<128x128xbf16>, vector<16x128xf32> -> vector<16x128xf32>
    %c0_3 = arith.constant 0 : index
    %c0_4 = arith.constant 0 : index
    %3 = vector.load %arg3[%c0_3, %c0_4] : memref<1x128xf32, #tpu.memory_space<vmem>>, vector<1x128xf32>
    %4 = vector.broadcast %3 : vector<1x128xf32> to vector<16x128xf32>
    %5 = arith.addf %2, %4 : vector<16x128xf32>
    %cst_5 = arith.constant 0.00999999977 : f32
    %6 = vector.broadcast %cst_5 : f32 to vector<16x128xf32>
    %7 = arith.mulf %6, %5 : vector<16x128xf32>
    %8 = arith.maximumf %5, %7 : vector<16x128xf32>
    %9 = arith.truncf %8 : vector<16x128xf32> to vector<16x128xbf16>
    %c0_6 = arith.constant 0 : index
    %c0_7 = arith.constant 0 : index
    %10 = vector.load %arg4[%c0_6, %c0_7] : memref<128x128xbf16, #tpu.memory_space<vmem>>, vector<128x128xbf16>
    %cst_8 = arith.constant dense<0.000000e+00> : vector<16x128xf32>
    %11 = tpu.matmul %9, %10, %cst_8 {dimension_numbers = #tpu.dot_dimension_numbers<[1], [0], [0], [1], [0, 0, 1, 1], [], []>} : vector<16x128xbf16>, vector<128x128xbf16>, vector<16x128xf32> -> vector<16x128xf32>
    %c0_9 = arith.constant 0 : index
    %c0_10 = arith.constant 0 : index
    %12 = vector.load %arg5[%c0_9, %c0_10] : memref<1x128xf32, #tpu.memory_space<vmem>>, vector<1x128xf32>
    %13 = vector.broadcast %12 : vector<1x128xf32> to vector<16x128xf32>
    %14 = arith.addf %11, %13 : vector<16x128xf32>
    %cst_11 = arith.constant 0.00999999977 : f32
    %15 = vector.broadcast %cst_11 : f32 to vector<16x128xf32>
    %16 = arith.mulf %15, %14 : vector<16x128xf32>
    %17 = arith.maximumf %14, %16 : vector<16x128xf32>
    %18 = arith.truncf %17 : vector<16x128xf32> to vector<16x128xbf16>
    %c0_12 = arith.constant 0 : index
    %c0_13 = arith.constant 0 : index
    %19 = vector.load %arg6[%c0_12, %c0_13] : memref<128x128xbf16, #tpu.memory_space<vmem>>, vector<128x128xbf16>
    %cst_14 = arith.constant dense<0.000000e+00> : vector<16x128xf32>
    %20 = tpu.matmul %18, %19, %cst_14 {dimension_numbers = #tpu.dot_dimension_numbers<[1], [0], [0], [1], [0, 0, 1, 1], [], []>} : vector<16x128xbf16>, vector<128x128xbf16>, vector<16x128xf32> -> vector<16x128xf32>
    %c0_15 = arith.constant 0 : index
    %c0_16 = arith.constant 0 : index
    %21 = vector.load %arg7[%c0_15, %c0_16] : memref<1x128xf32, #tpu.memory_space<vmem>>, vector<1x128xf32>
    %22 = vector.broadcast %21 : vector<1x128xf32> to vector<16x128xf32>
    %23 = arith.addf %20, %22 : vector<16x128xf32>
    %c0_17 = arith.constant 0 : index
    %c0_18 = arith.constant 0 : index
    %24 = vector.load %arg8[%c0_17, %c0_18] : memref<16x128xf32, #tpu.memory_space<vmem>>, vector<16x128xf32>
    tpu.vector_store %arg8[%c0_17, %c0_18], %23 {strides = array<i32>} : memref<16x128xf32, #tpu.memory_space<vmem>>, vector<16x128xf32>,
    return
  }
  func.func @transform_0(%arg0: i32) -> (i32, i32) {
    %c0_i32 = arith.constant 0 : i32
    %c0_i32_0 = arith.constant 0 : i32
    return %arg0, %c0_i32 : i32, i32
  }
  func.func @transform_1(%arg0: i32) -> (i32, i32) {
    %c0_i32 = arith.constant 0 : i32
    %c0_i32_0 = arith.constant 0 : i32
    %c0_i32_1 = arith.constant 0 : i32
    return %c0_i32, %c0_i32_0 : i32, i32
  }
  func.func @transform_2(%arg0: i32) -> (i32, i32) {
    %c0_i32 = arith.constant 0 : i32
    %c0_i32_0 = arith.constant 0 : i32
    %c0_i32_1 = arith.constant 0 : i32
    return %c0_i32, %c0_i32_0 : i32, i32
  }
  func.func @transform_3(%arg0: i32) -> (i32, i32) {
    %c0_i32 = arith.constant 0 : i32
    %c0_i32_0 = arith.constant 0 : i32
    %c0_i32_1 = arith.constant 0 : i32
    return %c0_i32, %c0_i32_0 : i32, i32
  }
  func.func @transform_4(%arg0: i32) -> (i32, i32) {
    %c0_i32 = arith.constant 0 : i32
    %c0_i32_0 = arith.constant 0 : i32
    %c0_i32_1 = arith.constant 0 : i32
    return %c0_i32, %c0_i32_0 : i32, i32
  }
  func.func @transform_5(%arg0: i32) -> (i32, i32) {
    %c0_i32 = arith.constant 0 : i32
    %c0_i32_0 = arith.constant 0 : i32
    %c0_i32_1 = arith.constant 0 : i32
    return %c0_i32, %c0_i32_0 : i32, i32
  }
  func.func @transform_6(%arg0: i32) -> (i32, i32) {
    %c0_i32 = arith.constant 0 : i32
    %c0_i32_0 = arith.constant 0 : i32
    %c0_i32_1 = arith.constant 0 : i32
    return %c0_i32, %c0_i32_0 : i32, i32
  }
  func.func @transform_7(%arg0: i32) -> (i32, i32) {
    %c0_i32 = arith.constant 0 : i32
    %c0_i32_0 = arith.constant 0 : i32
    return %arg0, %c0_i32 : i32, i32
  }
}

module attributes {stable_mosaic.version = 11 : i64} {
  func.func @mlp_kernel(%arg0: i32, %arg1: memref<16x128xbf16, #tpu.memory_space<vmem>>, %arg2: memref<128x128xbf16, #tpu.memory_space<vmem>>, %arg3: memref<1x128xf32, #tpu.memory_space<vmem>>, %arg4: memref<128x128xbf16, #tpu.memory_space<vmem>>, %arg5: memref<1x128xf32, #tpu.memory_space<vmem>>, %arg6: memref<128x128xbf16, #tpu.memory_space<vmem>>, %arg7: memref<1x128xf32, #tpu.memory_space<vmem>>, %arg8: memref<16x128xf32, #tpu.memory_space<vmem>>) attributes {dimension_semantics = [#tpu.dimension_semantics<parallel>], iteration_bounds = array<i64: 1>, scalar_prefetch = 0 : i64, scratch_operands = 0 : i64, tpu.core_type = #tpu.core_type<tc>, window_params = [{transform_indices = @transform_0, window_bounds = array<i64: 16, 128>}, {pipeline_mode = #tpu.pipeline_mode<synchronous>, transform_indices = @transform_1, window_bounds = array<i64: 128, 128>}, {pipeline_mode = #tpu.pipeline_mode<synchronous>, transform_indices = @transform_2, window_bounds = array<i64: 1, 128>}, {pipeline_mode = #tpu.pipeline_mode<synchronous>, transform_indices = @transform_3, window_bounds = array<i64: 128, 128>}, {pipeline_mode = #tpu.pipeline_mode<synchronous>, transform_indices = @transform_4, window_bounds = array<i64: 1, 128>}, {pipeline_mode = #tpu.pipeline_mode<synchronous>, transform_indices = @transform_5, window_bounds = array<i64: 128, 128>}, {pipeline_mode = #tpu.pipeline_mode<synchronous>, transform_indices = @transform_6, window_bounds = array<i64: 1, 128>}, {transform_indices = @transform_7, window_bounds = array<i64: 16, 128>}]} {
    %c0 = arith.constant 0 : index
    %c0_0 = arith.constant 0 : index
    %0 = vector.load %arg1[%c0, %c0_0] : memref<16x128xbf16, #tpu.memory_space<vmem>>, vector<16x128xbf16>
    %c0_1 = arith.constant 0 : index
    %c0_2 = arith.constant 0 : index
    %1 = vector.load %arg2[%c0_1, %c0_2] : memref<128x128xbf16, #tpu.memory_space<vmem>>, vector<128x128xbf16>
    %cst = arith.constant dense<0.000000e+00> : vector<16x128xf32>
    %2 = tpu.matmul %0, %1, %cst {dimension_numbers = #tpu.dot_dimension_numbers<[1], [0], [0], [1], [0, 0, 1, 1], [], []>} : vector<16x128xbf16>, vector<128x128xbf16>, vector<16x128xf32> -> vector<16x128xf32>
    %c0_3 = arith.constant 0 : index
    %c0_4 = arith.constant 0 : index
    %3 = vector.load %arg3[%c0_3, %c0_4] : memref<1x128xf32, #tpu.memory_space<vmem>>, vector<1x128xf32>
    %4 = vector.broadcast %3 : vector<1x128xf32> to vector<16x128xf32>
    %5 = arith.addf %2, %4 : vector<16x128xf32>
    %cst_5 = arith.constant 0.00999999977 : f32
    %6 = vector.broadcast %cst_5 : f32 to vector<16x128xf32>
    %7 = arith.mulf %6, %5 : vector<16x128xf32>
    %8 = arith.maximumf %5, %7 : vector<16x128xf32>
    %9 = arith.truncf %8 : vector<16x128xf32> to vector<16x128xbf16>
    %c0_6 = arith.constant 0 : index
    %c0_7 = arith.constant 0 : index
    %10 = vector.load %arg4[%c0_6, %c0_7] : memref<128x128xbf16, #tpu.memory_space<vmem>>, vector<128x128xbf16>
    %cst_8 = arith.constant dense<0.000000e+00> : vector<16x128xf32>
    %11 = tpu.matmul %9, %10, %cst_8 {dimension_numbers = #tpu.dot_dimension_numbers<[1], [0], [0], [1], [0, 0, 1, 1], [], []>} : vector<16x128xbf16>, vector<128x128xbf16>, vector<16x128xf32> -> vector<16x128xf32>
    %c0_9 = arith.constant 0 : index
    %c0_10 = arith.constant 0 : index
    %12 = vector.load %arg5[%c0_9, %c0_10] : memref<1x128xf32, #tpu.memory_space<vmem>>, vector<1x128xf32>
    %13 = vector.broadcast %12 : vector<1x128xf32> to vector<16x128xf32>
    %14 = arith.addf %11, %13 : vector<16x128xf32>
    %cst_11 = arith.constant 0.00999999977 : f32
    %15 = vector.broadcast %cst_11 : f32 to vector<16x128xf32>
    %16 = arith.mulf %15, %14 : vector<16x128xf32>
    %17 = arith.maximumf %14, %16 : vector<16x128xf32>
    %18 = arith.truncf %17 : vector<16x128xf32> to vector<16x128xbf16>
    %c0_12 = arith.constant 0 : index
    %c0_13 = arith.constant 0 : index
    %19 = vector.load %arg6[%c0_12, %c0_13] : memref<128x128xbf16, #tpu.memory_space<vmem>>, vector<128x128xbf16>
    %cst_14 = arith.constant dense<0.000000e+00> : vector<16x128xf32>
    %20 = tpu.matmul %18, %19, %cst_14 {dimension_numbers = #tpu.dot_dimension_numbers<[1], [0], [0], [1], [0, 0, 1, 1], [], []>} : vector<16x128xbf16>, vector<128x128xbf16>, vector<16x128xf32> -> vector<16x128xf32>
    %c0_15 = arith.constant 0 : index
    %c0_16 = arith.constant 0 : index
    %21 = vector.load %arg7[%c0_15, %c0_16] : memref<1x128xf32, #tpu.memory_space<vmem>>, vector<1x128xf32>
    %22 = vector.broadcast %21 : vector<1x128xf32> to vector<16x128xf32>
    %23 = arith.addf %20, %22 : vector<16x128xf32>
    %c0_17 = arith.constant 0 : index
    %c0_18 = arith.constant 0 : index
    %24 = vector.load %arg8[%c0_17, %c0_18] : memref<16x128xf32, #tpu.memory_space<vmem>>, vector<16x128xf32>
    tpu.vector_store %arg8[%c0_17, %c0_18], %23 {strides = array<i32>} : memref<16x128xf32, #tpu.memory_space<vmem>>, vector<16x128xf32>,
    return
  }
  func.func @transform_0(%arg0: i32) -> (i32, i32) {
    %c0_i32 = arith.constant 0 : i32
    %c0_i32_0 = arith.constant 0 : i32
    return %arg0, %c0_i32 : i32, i32
  }
  func.func @transform_1(%arg0: i32) -> (i32, i32) {
    %c0_i32 = arith.constant 0 : i32
    %c0_i32_0 = arith.constant 0 : i32
    %c0_i32_1 = arith.constant 0 : i32
    return %c0_i32, %c0_i32_0 : i32, i32
  }
  func.func @transform_2(%arg0: i32) -> (i32, i32) {
    %c0_i32 = arith.constant 0 : i32
    %c0_i32_0 = arith.constant 0 : i32
    %c0_i32_1 = arith.constant 0 : i32
    return %c0_i32, %c0_i32_0 : i32, i32
  }
  func.func @transform_3(%arg0: i32) -> (i32, i32) {
    %c0_i32 = arith.constant 0 : i32
    %c0_i32_0 = arith.constant 0 : i32
    %c0_i32_1 = arith.constant 0 : i32
    return %c0_i32, %c0_i32_0 : i32, i32
  }
  func.func @transform_4(%arg0: i32) -> (i32, i32) {
    %c0_i32 = arith.constant 0 : i32
    %c0_i32_0 = arith.constant 0 : i32
    %c0_i32_1 = arith.constant 0 : i32
    return %c0_i32, %c0_i32_0 : i32, i32
  }
  func.func @transform_5(%arg0: i32) -> (i32, i32) {
    %c0_i32 = arith.constant 0 : i32
    %c0_i32_0 = arith.constant 0 : i32
    %c0_i32_1 = arith.constant 0 : i32
    return %c0_i32, %c0_i32_0 : i32, i32
  }
  func.func @transform_6(%arg0: i32) -> (i32, i32) {
    %c0_i32 = arith.constant 0 : i32
    %c0_i32_0 = arith.constant 0 : i32
    %c0_i32_1 = arith.constant 0 : i32
    return %c0_i32, %c0_i32_0 : i32, i32
  }
  func.func @transform_7(%arg0: i32) -> (i32, i32) {
    %c0_i32 = arith.constant 0 : i32
    %c0_i32_0 = arith.constant 0 : i32
    return %arg0, %c0_i32 : i32, i32
  }
}

</mosaic_0001>

<llo_original>
// kernel: mlp_forward_padded.1
$region0: #{mlp_forward_padded.1}
  #allocation0 [shape = 'u32[]', space=smem, size = 0x4, offset = 0x4, fixed_abs, tag = 'smem constant byte address 0x4 - core index']
  #allocation1 [shape = 'u32[72,128]{1,0:T(1,128)}', space=vmem, size = 0x9000, scoped, tag = 'internal scratch']
  %s0 = inlined_call_operand.vmem [shape: bf16[16,128], index: 0, kind: input, shape index: {}]
  %s1 = inlined_call_operand.hbm [shape: bf16[128,128], index: 1, kind: input, shape index: {}]
  %s2 = inlined_call_operand.vmem [shape: f32[1,128], index: 2, kind: input, shape index: {}]
  %s3 = inlined_call_operand.hbm [shape: bf16[128,128], index: 3, kind: input, shape index: {}]
  %s4 = inlined_call_operand.vmem [shape: f32[1,128], index: 4, kind: input, shape index: {}]
  %s5 = inlined_call_operand.hbm [shape: bf16[128,128], index: 5, kind: input, shape index: {}]
  %s6 = inlined_call_operand.vmem [shape: f32[1,128], index: 6, kind: input, shape index: {}]
  %s7 = inlined_call_operand.vmem [shape: f32[16,128], index: 7, kind: output, shape index: {}]
  %s8 = sld [smem:[#allocation0]]
  $region50: #{mlp_forward_padded.1} parent=0
    _
  %s10 = ssub.s32 1, %s8
  %s11 = scalar_select 0, %s10, %s8
  $region1: #{mlp_forward_padded.1} parent=0
    #allocation2 [shape = 'u8[32768]{0}', space=vmem, size = 0x8000, scoped, tag = 'input window, operand 1, single buffered']
    #allocation3 [shape = 's32[1]{0}', space=sflag, size = 0x4, scoped, tag = 'scoped memory for mlp_forward_padded.1']
    #allocation4 [shape = 'u8[32768]{0}', space=vmem, size = 0x8000, scoped, tag = 'input window, operand 3, single buffered']
    #allocation5 [shape = 's32[1]{0}', space=sflag, size = 0x4, scoped, tag = 'scoped memory for mlp_forward_padded.1']
    #allocation6 [shape = 'u8[32768]{0}', space=vmem, size = 0x8000, scoped, tag = 'input window, operand 5, single buffered']
    %12 = vsyncpa [#allocation3], 0
    %13 = vsyncpa [#allocation5], 0
    // Predicated region
    $region2: #{mlp_forward_padded.1} parent=1 // pred_check
      _
    $region3: #{mlp_forward_padded.1} parent=1 // pred_check_branch
      %15 = sbr.rel (0) target = $region5
    $region4: #{mlp_forward_padded.1} parent=1 // pred_region
      _
    $region5: #{mlp_forward_padded.1} parent=1 // pred_fallthru
      _
    // Predicated region
    $region6: #{mlp_forward_padded.1} parent=1 // pred_check
      _
    $region7: #{mlp_forward_padded.1} parent=1 // pred_check_branch
      %17 = sbr.rel (0) target = $region9
    $region8: #{mlp_forward_padded.1} parent=1 // pred_region
      %19 = vsyncadd [#allocation3], 0
      %s20 = sshll.u32 %s1, 4
      %s21 = int_to_ptr.hbm [resolvable:$true] %s20
      %s22 = sshll.u32 [#allocation2], 4
      %s23 = int_to_ptr.vmem [resolvable:$true] %s22
      %28 = dma.hbm_to_vmem [thread:$0]  %s21, 1024, %s23, [#allocation3], 64, 64, 4
    $region9: #{mlp_forward_padded.1} parent=1 // pred_fallthru
      _
    // Predicated region
    $region10: #{mlp_forward_padded.1} parent=1 // pred_check
      _
    $region11: #{mlp_forward_padded.1} parent=1 // pred_check_branch
      %30 = sbr.rel (0) target = $region13
    $region12: #{mlp_forward_padded.1} parent=1 // pred_region
      _
    $region13: #{mlp_forward_padded.1} parent=1 // pred_fallthru
      _
    // Predicated region
    $region14: #{mlp_forward_padded.1} parent=1 // pred_check
      _
    $region15: #{mlp_forward_padded.1} parent=1 // pred_check_branch
      %32 = sbr.rel (0) target = $region17
    $region16: #{mlp_forward_padded.1} parent=1 // pred_region
      %34 = vsyncadd [#allocation5], 0
      %s35 = sshll.u32 %s3, 4
      %s36 = int_to_ptr.hbm [resolvable:$true] %s35
      %s37 = sshll.u32 [#allocation4], 4
      %s38 = int_to_ptr.vmem [resolvable:$true] %s37
      %43 = dma.hbm_to_vmem [thread:$0]  %s36, 1024, %s38, [#allocation5], 64, 64, 4
    $region17: #{mlp_forward_padded.1} parent=1 // pred_fallthru
      _
    // Predicated region
    $region18: #{mlp_forward_padded.1} parent=1 // pred_check
      _
    $region19: #{mlp_forward_padded.1} parent=1 // pred_check_branch
      %45 = sbr.rel (0) target = $region21
    $region20: #{mlp_forward_padded.1} parent=1 // pred_region
      _
    $region21: #{mlp_forward_padded.1} parent=1 // pred_fallthru
      _
    // Predicated region
    $region22: #{mlp_forward_padded.1} parent=1 // pred_check
      _
    $region23: #{mlp_forward_padded.1} parent=1 // pred_check_branch
      %47 = sbr.rel (0) target = $region25
    $region24: #{mlp_forward_padded.1} parent=1 // pred_region
      %49 = vsyncadd [#allocation5], 0
      %s50 = sshll.u32 %s5, 4
      %s51 = int_to_ptr.hbm [resolvable:$true] %s50
      %s52 = sshll.u32 [#allocation6], 4
      %s53 = int_to_ptr.vmem [resolvable:$true] %s52
      %58 = dma.hbm_to_vmem [thread:$0]  %s51, 1024, %s53, [#allocation5], 64, 64, 4
    $region25: #{mlp_forward_padded.1} parent=1 // pred_fallthru
      _
    // Predicated region
    $region26: #{mlp_forward_padded.1} parent=1 // pred_check
      _
    $region27: #{mlp_forward_padded.1} parent=1 // pred_check_branch
      %60 = sbr.rel (0) target = $region29
    $region28: #{mlp_forward_padded.1} parent=1 // pred_region
      _
    $region29: #{mlp_forward_padded.1} parent=1 // pred_fallthru
      _
    // Predicated region
    $region30: #{mlp_forward_padded.1} parent=1 // pred_check
      _
    $region31: #{mlp_forward_padded.1} parent=1 // pred_check_branch
      %62 = sbr.rel (0) target = $region33
    $region32: #{mlp_forward_padded.1} parent=1 // pred_region
      %64 = dma.done [#allocation3], 1024
    $region33: #{mlp_forward_padded.1} parent=1 // pred_fallthru
      _
    // Predicated region
    $region34: #{mlp_forward_padded.1} parent=1 // pred_check
      _
    $region35: #{mlp_forward_padded.1} parent=1 // pred_check_branch
      %66 = sbr.rel (0) target = $region37
    $region36: #{mlp_forward_padded.1} parent=1 // pred_region
      %68 = dma.done [#allocation5], 1024
    $region37: #{mlp_forward_padded.1} parent=1 // pred_fallthru
      _
    // Predicated region
    $region38: #{mlp_forward_padded.1} parent=1 // pred_check
      _
    $region39: #{mlp_forward_padded.1} parent=1 // pred_check_branch
      %70 = sbr.rel (0) target = $region41
    $region40: #{mlp_forward_padded.1} parent=1 // pred_region
      %72 = dma.done [#allocation5], 1024
    $region41: #{mlp_forward_padded.1} parent=1 // pred_fallthru
      _
    %v73 = vld [vmem:[%s0] sm:$0xf]
    %v74 = vld [vmem:[%s0 + $0x4] sm:$0xf]
    %v75 = vld [vmem:[#allocation2] sm:$0xf]
    %v76 = vld [vmem:[#allocation2 + $0x4] sm:$0xf]
    %v77 = vld [vmem:[#allocation2 + $0x8] sm:$0xf]
    %v78 = vld [vmem:[#allocation2 + $0xc] sm:$0xf]
    %v79 = vld [vmem:[#allocation2 + $0x10] sm:$0xf]
    %v80 = vld [vmem:[#allocation2 + $0x14] sm:$0xf]
    %v81 = vld [vmem:[#allocation2 + $0x18] sm:$0xf]
    %v82 = vld [vmem:[#allocation2 + $0x1c] sm:$0xf]
    %v83 = vld [vmem:[#allocation2 + $0x20] sm:$0xf]
    %v84 = vld [vmem:[#allocation2 + $0x24] sm:$0xf]
    %v85 = vld [vmem:[#allocation2 + $0x28] sm:$0xf]
    %v86 = vld [vmem:[#allocation2 + $0x2c] sm:$0xf]
    %v87 = vld [vmem:[#allocation2 + $0x30] sm:$0xf]
    %v88 = vld [vmem:[#allocation2 + $0x34] sm:$0xf]
    %v89 = vld [vmem:[#allocation2 + $0x38] sm:$0xf]
    %v90 = vld [vmem:[#allocation2 + $0x3c] sm:$0xf]
    %v91 = vld [vmem:[%s2] sm:$0x1]
    %v93 = vperm.slane %v91, 0
    %v97 = vunpack.c.l.b16 %v73
    %v98 = vunpack.c.l.b16 %v74
    %v99 = vpack.c.b16 %v98, %v97
    %v117 = vunpack.c.l.b16 %v75
    %v118 = vunpack.c.l.b16 %v76
    %v119 = vunpack.c.l.b16 %v77
    %v120 = vunpack.c.l.b16 %v78
    %v121 = vunpack.c.l.b16 %v79
    %v122 = vunpack.c.l.b16 %v80
    %v123 = vunpack.c.l.b16 %v81
    %v124 = vunpack.c.l.b16 %v82
    %v125 = vunpack.c.l.b16 %v83
    %v126 = vunpack.c.l.b16 %v84
    %v127 = vunpack.c.l.b16 %v85
    %v128 = vunpack.c.l.b16 %v86
    %v129 = vunpack.c.l.b16 %v87
    %v130 = vunpack.c.l.b16 %v88
    %v131 = vunpack.c.l.b16 %v89
    %v132 = vunpack.c.l.b16 %v90
    %v133 = vpack.c.b16 %v118, %v117
    %v134 = vpack.c.b16 %v120, %v119
    %v135 = vpack.c.b16 %v122, %v121
    %v136 = vpack.c.b16 %v124, %v123
    %v137 = vpack.c.b16 %v126, %v125
    %v138 = vpack.c.b16 %v128, %v127
    %v139 = vpack.c.b16 %v130, %v129
    %v140 = vpack.c.b16 %v132, %v131
    %149 = vmatpush.bf16.msra.mxu0 %v140
    %150 = vmatpush.bf16.msra.mxu0 %v139
    %151 = vmatpush.bf16.msra.mxu0 %v138
    %152 = vmatpush.bf16.msra.mxu0 %v137
    %153 = vmatpush.bf16.msra.mxu0 %v136
    %154 = vmatpush.bf16.msra.mxu0 %v135
    %155 = vmatpush.bf16.msra.mxu0 %v134
    %156 = vmatpush.bf16.msra.mxu0 %v133
    %157 = vmatmul.bf16.gmra.mxu0 %v99
    %v158 = vpop.f32.mrf.mxu0
    %v159 = vadd.f32 %v93, %v158
    %v160 = vpop.f32.mrf.mxu0
    %v161 = vadd.f32 %v93, %v160
    %162 = vdwg.mxu0
    %v163 = vmul.f32 %v159, 0.01
    %v164 = vmul.f32 %v161, 0.01
    %v165 = vmax.f32 %v159, %v163
    %v166 = vmax.f32 %v161, %v164
    %v167 = vpack.c.bf16 %v166, %v165
    %v168 = vld [vmem:[#allocation4] sm:$0xf]
    %v169 = vld [vmem:[#allocation4 + $0x4] sm:$0xf]
    %v170 = vld [vmem:[#allocation4 + $0x8] sm:$0xf]
    %v171 = vld [vmem:[#allocation4 + $0xc] sm:$0xf]
    %v172 = vld [vmem:[#allocation4 + $0x10] sm:$0xf]
    %v173 = vld [vmem:[#allocation4 + $0x14] sm:$0xf]
    %v174 = vld [vmem:[#allocation4 + $0x18] sm:$0xf]
    %v175 = vld [vmem:[#allocation4 + $0x1c] sm:$0xf]
    %v176 = vld [vmem:[#allocation4 + $0x20] sm:$0xf]
    %v177 = vld [vmem:[#allocation4 + $0x24] sm:$0xf]
    %v178 = vld [vmem:[#allocation4 + $0x28] sm:$0xf]
    %v179 = vld [vmem:[#allocation4 + $0x2c] sm:$0xf]
    %v180 = vld [vmem:[#allocation4 + $0x30] sm:$0xf]
    %v181 = vld [vmem:[#allocation4 + $0x34] sm:$0xf]
    %v182 = vld [vmem:[#allocation4 + $0x38] sm:$0xf]
    %v183 = vld [vmem:[#allocation4 + $0x3c] sm:$0xf]
    %v184 = vld [vmem:[%s4] sm:$0x1]
    %v186 = vperm.slane %v184, 0
    %v204 = vunpack.c.l.b16 %v168
    %v205 = vunpack.c.l.b16 %v169
    %v206 = vunpack.c.l.b16 %v170
    %v207 = vunpack.c.l.b16 %v171
    %v208 = vunpack.c.l.b16 %v172
    %v209 = vunpack.c.l.b16 %v173
    %v210 = vunpack.c.l.b16 %v174
    %v211 = vunpack.c.l.b16 %v175
    %v212 = vunpack.c.l.b16 %v176
    %v213 = vunpack.c.l.b16 %v177
    %v214 = vunpack.c.l.b16 %v178
    %v215 = vunpack.c.l.b16 %v179
    %v216 = vunpack.c.l.b16 %v180
    %v217 = vunpack.c.l.b16 %v181
    %v218 = vunpack.c.l.b16 %v182
    %v219 = vunpack.c.l.b16 %v183
    %v220 = vpack.c.b16 %v205, %v204
    %v221 = vpack.c.b16 %v207, %v206
    %v222 = vpack.c.b16 %v209, %v208
    %v223 = vpack.c.b16 %v211, %v210
    %v224 = vpack.c.b16 %v213, %v212
    %v225 = vpack.c.b16 %v215, %v214
    %v226 = vpack.c.b16 %v217, %v216
    %v227 = vpack.c.b16 %v219, %v218
    %236 = vmatpush.bf16.msra.mxu0 %v227
    %237 = vmatpush.bf16.msra.mxu0 %v226
    %238 = vmatpush.bf16.msra.mxu0 %v225
    %239 = vmatpush.bf16.msra.mxu0 %v224
    %240 = vmatpush.bf16.msra.mxu0 %v223
    %241 = vmatpush.bf16.msra.mxu0 %v222
    %242 = vmatpush.bf16.msra.mxu0 %v221
    %243 = vmatpush.bf16.msra.mxu0 %v220
    %244 = vmatmul.bf16.gmra.mxu0 %v167
    %v245 = vpop.f32.mrf.mxu0
    %v246 = vadd.f32 %v186, %v245
    %v247 = vpop.f32.mrf.mxu0
    %v248 = vadd.f32 %v186, %v247
    %249 = vdwg.mxu0
    %v250 = vmul.f32 %v246, 0.01
    %v251 = vmul.f32 %v248, 0.01
    %v252 = vmax.f32 %v246, %v250
    %v253 = vmax.f32 %v248, %v251
    %v254 = vpack.c.bf16 %v253, %v252
    %v255 = vld [vmem:[#allocation6] sm:$0xf]
    %v256 = vld [vmem:[#allocation6 + $0x4] sm:$0xf]
    %v257 = vld [vmem:[#allocation6 + $0x8] sm:$0xf]
    %v258 = vld [vmem:[#allocation6 + $0xc] sm:$0xf]
    %v259 = vld [vmem:[#allocation6 + $0x10] sm:$0xf]
    %v260 = vld [vmem:[#allocation6 + $0x14] sm:$0xf]
    %v261 = vld [vmem:[#allocation6 + $0x18] sm:$0xf]
    %v262 = vld [vmem:[#allocation6 + $0x1c] sm:$0xf]
    %v263 = vld [vmem:[#allocation6 + $0x20] sm:$0xf]
    %v264 = vld [vmem:[#allocation6 + $0x24] sm:$0xf]
    %v265 = vld [vmem:[#allocation6 + $0x28] sm:$0xf]
    %v266 = vld [vmem:[#allocation6 + $0x2c] sm:$0xf]
    %v267 = vld [vmem:[#allocation6 + $0x30] sm:$0xf]
    %v268 = vld [vmem:[#allocation6 + $0x34] sm:$0xf]
    %v269 = vld [vmem:[#allocation6 + $0x38] sm:$0xf]
    %v270 = vld [vmem:[#allocation6 + $0x3c] sm:$0xf]
    %v271 = vld [vmem:[%s6] sm:$0x1]
    %v273 = vperm.slane %v271, 0
    %v291 = vunpack.c.l.b16 %v255
    %v292 = vunpack.c.l.b16 %v256
    %v293 = vunpack.c.l.b16 %v257
    %v294 = vunpack.c.l.b16 %v258
    %v295 = vunpack.c.l.b16 %v259
    %v296 = vunpack.c.l.b16 %v260
    %v297 = vunpack.c.l.b16 %v261
    %v298 = vunpack.c.l.b16 %v262
    %v299 = vunpack.c.l.b16 %v263
    %v300 = vunpack.c.l.b16 %v264
    %v301 = vunpack.c.l.b16 %v265
    %v302 = vunpack.c.l.b16 %v266
    %v303 = vunpack.c.l.b16 %v267
    %v304 = vunpack.c.l.b16 %v268
    %v305 = vunpack.c.l.b16 %v269
    %v306 = vunpack.c.l.b16 %v270
    %v307 = vpack.c.b16 %v292, %v291
    %v308 = vpack.c.b16 %v294, %v293
    %v309 = vpack.c.b16 %v296, %v295
    %v310 = vpack.c.b16 %v298, %v297
    %v311 = vpack.c.b16 %v300, %v299
    %v312 = vpack.c.b16 %v302, %v301
    %v313 = vpack.c.b16 %v304, %v303
    %v314 = vpack.c.b16 %v306, %v305
    %323 = vmatpush.bf16.msra.mxu0 %v314
    %324 = vmatpush.bf16.msra.mxu0 %v313
    %325 = vmatpush.bf16.msra.mxu0 %v312
    %326 = vmatpush.bf16.msra.mxu0 %v311
    %327 = vmatpush.bf16.msra.mxu0 %v310
    %328 = vmatpush.bf16.msra.mxu0 %v309
    %329 = vmatpush.bf16.msra.mxu0 %v308
    %330 = vmatpush.bf16.msra.mxu0 %v307
    %331 = vmatmul.bf16.gmra.mxu0 %v254
    %v332 = vpop.f32.mrf.mxu0
    %v333 = vadd.f32 %v273, %v332
    %v334 = vpop.f32.mrf.mxu0
    %v335 = vadd.f32 %v273, %v334
    %336 = vdwg.mxu0
    %337 = vst [vmem:[%s7] sm:$0xff] %v333
    %338 = vst [vmem:[%s7 + $0x8] sm:$0xff] %v335
    // Predicated region
    $region42: #{mlp_forward_padded.1} parent=1 // pred_check
      _
    $region43: #{mlp_forward_padded.1} parent=1 // pred_check_branch
      %340 = sbr.rel (0) target = $region45
    $region44: #{mlp_forward_padded.1} parent=1 // pred_region
      _
    $region45: #{mlp_forward_padded.1} parent=1 // pred_fallthru
      _
    // Predicated region
    $region46: #{mlp_forward_padded.1} parent=1 // pred_check
      _
    $region47: #{mlp_forward_padded.1} parent=1 // pred_check_branch
      %342 = sbr.rel (0) target = $region49
    $region48: #{mlp_forward_padded.1} parent=1 // pred_region
      _
    $region49: #{mlp_forward_padded.1} parent=1 // pred_fallthru
      _
    %343 = vsyncpa [#allocation3], 1
    %344 = vsyncpa [#allocation5], 1

// kernel: mlp_forward_padded.1
$region0: #{mlp_forward_padded.1}
  #allocation0 [shape = 'u32[]', space=smem, size = 0x4, offset = 0x4, fixed_abs, tag = 'smem constant byte address 0x4 - core index']
  #allocation1 [shape = 'u32[72,128]{1,0:T(1,128)}', space=vmem, size = 0x9000, scoped, tag = 'internal scratch']
  %s0 = inlined_call_operand.vmem [shape: bf16[16,128], index: 0, kind: input, shape index: {}]
  %s1 = inlined_call_operand.hbm [shape: bf16[128,128], index: 1, kind: input, shape index: {}]
  %s2 = inlined_call_operand.vmem [shape: f32[1,128], index: 2, kind: input, shape index: {}]
  %s3 = inlined_call_operand.hbm [shape: bf16[128,128], index: 3, kind: input, shape index: {}]
  %s4 = inlined_call_operand.vmem [shape: f32[1,128], index: 4, kind: input, shape index: {}]
  %s5 = inlined_call_operand.hbm [shape: bf16[128,128], index: 5, kind: input, shape index: {}]
  %s6 = inlined_call_operand.vmem [shape: f32[1,128], index: 6, kind: input, shape index: {}]
  %s7 = inlined_call_operand.vmem [shape: f32[16,128], index: 7, kind: output, shape index: {}]
  %s8 = sld [smem:[#allocation0]]
  $region50: #{mlp_forward_padded.1} parent=0
    _
  %s10 = ssub.s32 1, %s8
  %s11 = scalar_select 0, %s10, %s8
  $region1: #{mlp_forward_padded.1} parent=0
    #allocation2 [shape = 'u8[32768]{0}', space=vmem, size = 0x8000, scoped, tag = 'input window, operand 1, single buffered']
    #allocation3 [shape = 's32[1]{0}', space=sflag, size = 0x4, scoped, tag = 'scoped memory for mlp_forward_padded.1']
    #allocation4 [shape = 'u8[32768]{0}', space=vmem, size = 0x8000, scoped, tag = 'input window, operand 3, single buffered']
    #allocation5 [shape = 's32[1]{0}', space=sflag, size = 0x4, scoped, tag = 'scoped memory for mlp_forward_padded.1']
    #allocation6 [shape = 'u8[32768]{0}', space=vmem, size = 0x8000, scoped, tag = 'input window, operand 5, single buffered']
    %12 = vsyncpa [#allocation3], 0
    %13 = vsyncpa [#allocation5], 0
    // Predicated region
    $region2: #{mlp_forward_padded.1} parent=1 // pred_check
      _
    $region3: #{mlp_forward_padded.1} parent=1 // pred_check_branch
      %15 = sbr.rel (0) target = $region5
    $region4: #{mlp_forward_padded.1} parent=1 // pred_region
      _
    $region5: #{mlp_forward_padded.1} parent=1 // pred_fallthru
      _
    // Predicated region
    $region6: #{mlp_forward_padded.1} parent=1 // pred_check
      _
    $region7: #{mlp_forward_padded.1} parent=1 // pred_check_branch
      %17 = sbr.rel (0) target = $region9
    $region8: #{mlp_forward_padded.1} parent=1 // pred_region
      %19 = vsyncadd [#allocation3], 0
      %s20 = sshll.u32 %s1, 4
      %s21 = int_to_ptr.hbm [resolvable:$true] %s20
      %s22 = sshll.u32 [#allocation2], 4
      %s23 = int_to_ptr.vmem [resolvable:$true] %s22
      %28 = dma.hbm_to_vmem [thread:$0]  %s21, 1024, %s23, [#allocation3], 64, 64, 4
    $region9: #{mlp_forward_padded.1} parent=1 // pred_fallthru
      _
    // Predicated region
    $region10: #{mlp_forward_padded.1} parent=1 // pred_check
      _
    $region11: #{mlp_forward_padded.1} parent=1 // pred_check_branch
      %30 = sbr.rel (0) target = $region13
    $region12: #{mlp_forward_padded.1} parent=1 // pred_region
      _
    $region13: #{mlp_forward_padded.1} parent=1 // pred_fallthru
      _
    // Predicated region
    $region14: #{mlp_forward_padded.1} parent=1 // pred_check
      _
    $region15: #{mlp_forward_padded.1} parent=1 // pred_check_branch
      %32 = sbr.rel (0) target = $region17
    $region16: #{mlp_forward_padded.1} parent=1 // pred_region
      %34 = vsyncadd [#allocation5], 0
      %s35 = sshll.u32 %s3, 4
      %s36 = int_to_ptr.hbm [resolvable:$true] %s35
      %s37 = sshll.u32 [#allocation4], 4
      %s38 = int_to_ptr.vmem [resolvable:$true] %s37
      %43 = dma.hbm_to_vmem [thread:$0]  %s36, 1024, %s38, [#allocation5], 64, 64, 4
    $region17: #{mlp_forward_padded.1} parent=1 // pred_fallthru
      _
    // Predicated region
    $region18: #{mlp_forward_padded.1} parent=1 // pred_check
      _
    $region19: #{mlp_forward_padded.1} parent=1 // pred_check_branch
      %45 = sbr.rel (0) target = $region21
    $region20: #{mlp_forward_padded.1} parent=1 // pred_region
      _
    $region21: #{mlp_forward_padded.1} parent=1 // pred_fallthru
      _
    // Predicated region
    $region22: #{mlp_forward_padded.1} parent=1 // pred_check
      _
    $region23: #{mlp_forward_padded.1} parent=1 // pred_check_branch
      %47 = sbr.rel (0) target = $region25
    $region24: #{mlp_forward_padded.1} parent=1 // pred_region
      %49 = vsyncadd [#allocation5], 0
      %s50 = sshll.u32 %s5, 4
      %s51 = int_to_ptr.hbm [resolvable:$true] %s50
      %s52 = sshll.u32 [#allocation6], 4
      %s53 = int_to_ptr.vmem [resolvable:$true] %s52
      %58 = dma.hbm_to_vmem [thread:$0]  %s51, 1024, %s53, [#allocation5], 64, 64, 4
    $region25: #{mlp_forward_padded.1} parent=1 // pred_fallthru
      _
    // Predicated region
    $region26: #{mlp_forward_padded.1} parent=1 // pred_check
      _
    $region27: #{mlp_forward_padded.1} parent=1 // pred_check_branch
      %60 = sbr.rel (0) target = $region29
    $region28: #{mlp_forward_padded.1} parent=1 // pred_region
      _
    $region29: #{mlp_forward_padded.1} parent=1 // pred_fallthru
      _
    // Predicated region
    $region30: #{mlp_forward_padded.1} parent=1 // pred_check
      _
    $region31: #{mlp_forward_padded.1} parent=1 // pred_check_branch
      %62 = sbr.rel (0) target = $region33
    $region32: #{mlp_forward_padded.1} parent=1 // pred_region
      %64 = dma.done [#allocation3], 1024
    $region33: #{mlp_forward_padded.1} parent=1 // pred_fallthru
      _
    // Predicated region
    $region34: #{mlp_forward_padded.1} parent=1 // pred_check
      _
    $region35: #{mlp_forward_padded.1} parent=1 // pred_check_branch
      %66 = sbr.rel (0) target = $region37
    $region36: #{mlp_forward_padded.1} parent=1 // pred_region
      %68 = dma.done [#allocation5], 1024
    $region37: #{mlp_forward_padded.1} parent=1 // pred_fallthru
      _
    // Predicated region
    $region38: #{mlp_forward_padded.1} parent=1 // pred_check
      _
    $region39: #{mlp_forward_padded.1} parent=1 // pred_check_branch
      %70 = sbr.rel (0) target = $region41
    $region40: #{mlp_forward_padded.1} parent=1 // pred_region
      %72 = dma.done [#allocation5], 1024
    $region41: #{mlp_forward_padded.1} parent=1 // pred_fallthru
      _
    %v73 = vld [vmem:[%s0] sm:$0xf]
    %v74 = vld [vmem:[%s0 + $0x4] sm:$0xf]
    %v75 = vld [vmem:[#allocation2] sm:$0xf]
    %v76 = vld [vmem:[#allocation2 + $0x4] sm:$0xf]
    %v77 = vld [vmem:[#allocation2 + $0x8] sm:$0xf]
    %v78 = vld [vmem:[#allocation2 + $0xc] sm:$0xf]
    %v79 = vld [vmem:[#allocation2 + $0x10] sm:$0xf]
    %v80 = vld [vmem:[#allocation2 + $0x14] sm:$0xf]
    %v81 = vld [vmem:[#allocation2 + $0x18] sm:$0xf]
    %v82 = vld [vmem:[#allocation2 + $0x1c] sm:$0xf]
    %v83 = vld [vmem:[#allocation2 + $0x20] sm:$0xf]
    %v84 = vld [vmem:[#allocation2 + $0x24] sm:$0xf]
    %v85 = vld [vmem:[#allocation2 + $0x28] sm:$0xf]
    %v86 = vld [vmem:[#allocation2 + $0x2c] sm:$0xf]
    %v87 = vld [vmem:[#allocation2 + $0x30] sm:$0xf]
    %v88 = vld [vmem:[#allocation2 + $0x34] sm:$0xf]
    %v89 = vld [vmem:[#allocation2 + $0x38] sm:$0xf]
    %v90 = vld [vmem:[#allocation2 + $0x3c] sm:$0xf]
    %v91 = vld [vmem:[%s2] sm:$0x1]
    %v93 = vperm.slane %v91, 0
    %v97 = vunpack.c.l.b16 %v73
    %v98 = vunpack.c.l.b16 %v74
    %v99 = vpack.c.b16 %v98, %v97
    %v117 = vunpack.c.l.b16 %v75
    %v118 = vunpack.c.l.b16 %v76
    %v119 = vunpack.c.l.b16 %v77
    %v120 = vunpack.c.l.b16 %v78
    %v121 = vunpack.c.l.b16 %v79
    %v122 = vunpack.c.l.b16 %v80
    %v123 = vunpack.c.l.b16 %v81
    %v124 = vunpack.c.l.b16 %v82
    %v125 = vunpack.c.l.b16 %v83
    %v126 = vunpack.c.l.b16 %v84
    %v127 = vunpack.c.l.b16 %v85
    %v128 = vunpack.c.l.b16 %v86
    %v129 = vunpack.c.l.b16 %v87
    %v130 = vunpack.c.l.b16 %v88
    %v131 = vunpack.c.l.b16 %v89
    %v132 = vunpack.c.l.b16 %v90
    %v133 = vpack.c.b16 %v118, %v117
    %v134 = vpack.c.b16 %v120, %v119
    %v135 = vpack.c.b16 %v122, %v121
    %v136 = vpack.c.b16 %v124, %v123
    %v137 = vpack.c.b16 %v126, %v125
    %v138 = vpack.c.b16 %v128, %v127
    %v139 = vpack.c.b16 %v130, %v129
    %v140 = vpack.c.b16 %v132, %v131
    %149 = vmatpush.bf16.msra.mxu0 %v140
    %150 = vmatpush.bf16.msra.mxu0 %v139
    %151 = vmatpush.bf16.msra.mxu0 %v138
    %152 = vmatpush.bf16.msra.mxu0 %v137
    %153 = vmatpush.bf16.msra.mxu0 %v136
    %154 = vmatpush.bf16.msra.mxu0 %v135
    %155 = vmatpush.bf16.msra.mxu0 %v134
    %156 = vmatpush.bf16.msra.mxu0 %v133
    %157 = vmatmul.bf16.gmra.mxu0 %v99
    %v158 = vpop.f32.mrf.mxu0
    %v159 = vadd.f32 %v93, %v158
    %v160 = vpop.f32.mrf.mxu0
    %v161 = vadd.f32 %v93, %v160
    %162 = vdwg.mxu0
    %v163 = vmul.f32 %v159, 0.01
    %v164 = vmul.f32 %v161, 0.01
    %v165 = vmax.f32 %v159, %v163
    %v166 = vmax.f32 %v161, %v164
    %v167 = vpack.c.bf16 %v166, %v165
    %v168 = vld [vmem:[#allocation4] sm:$0xf]
    %v169 = vld [vmem:[#allocation4 + $0x4] sm:$0xf]
    %v170 = vld [vmem:[#allocation4 + $0x8] sm:$0xf]
    %v171 = vld [vmem:[#allocation4 + $0xc] sm:$0xf]
    %v172 = vld [vmem:[#allocation4 + $0x10] sm:$0xf]
    %v173 = vld [vmem:[#allocation4 + $0x14] sm:$0xf]
    %v174 = vld [vmem:[#allocation4 + $0x18] sm:$0xf]
    %v175 = vld [vmem:[#allocation4 + $0x1c] sm:$0xf]
    %v176 = vld [vmem:[#allocation4 + $0x20] sm:$0xf]
    %v177 = vld [vmem:[#allocation4 + $0x24] sm:$0xf]
    %v178 = vld [vmem:[#allocation4 + $0x28] sm:$0xf]
    %v179 = vld [vmem:[#allocation4 + $0x2c] sm:$0xf]
    %v180 = vld [vmem:[#allocation4 + $0x30] sm:$0xf]
    %v181 = vld [vmem:[#allocation4 + $0x34] sm:$0xf]
    %v182 = vld [vmem:[#allocation4 + $0x38] sm:$0xf]
    %v183 = vld [vmem:[#allocation4 + $0x3c] sm:$0xf]
    %v184 = vld [vmem:[%s4] sm:$0x1]
    %v186 = vperm.slane %v184, 0
    %v204 = vunpack.c.l.b16 %v168
    %v205 = vunpack.c.l.b16 %v169
    %v206 = vunpack.c.l.b16 %v170
    %v207 = vunpack.c.l.b16 %v171
    %v208 = vunpack.c.l.b16 %v172
    %v209 = vunpack.c.l.b16 %v173
    %v210 = vunpack.c.l.b16 %v174
    %v211 = vunpack.c.l.b16 %v175
    %v212 = vunpack.c.l.b16 %v176
    %v213 = vunpack.c.l.b16 %v177
    %v214 = vunpack.c.l.b16 %v178
    %v215 = vunpack.c.l.b16 %v179
    %v216 = vunpack.c.l.b16 %v180
    %v217 = vunpack.c.l.b16 %v181
    %v218 = vunpack.c.l.b16 %v182
    %v219 = vunpack.c.l.b16 %v183
    %v220 = vpack.c.b16 %v205, %v204
    %v221 = vpack.c.b16 %v207, %v206
    %v222 = vpack.c.b16 %v209, %v208
    %v223 = vpack.c.b16 %v211, %v210
    %v224 = vpack.c.b16 %v213, %v212
    %v225 = vpack.c.b16 %v215, %v214
    %v226 = vpack.c.b16 %v217, %v216
    %v227 = vpack.c.b16 %v219, %v218
    %236 = vmatpush.bf16.msra.mxu0 %v227
    %237 = vmatpush.bf16.msra.mxu0 %v226
    %238 = vmatpush.bf16.msra.mxu0 %v225
    %239 = vmatpush.bf16.msra.mxu0 %v224
    %240 = vmatpush.bf16.msra.mxu0 %v223
    %241 = vmatpush.bf16.msra.mxu0 %v222
    %242 = vmatpush.bf16.msra.mxu0 %v221
    %243 = vmatpush.bf16.msra.mxu0 %v220
    %244 = vmatmul.bf16.gmra.mxu0 %v167
    %v245 = vpop.f32.mrf.mxu0
    %v246 = vadd.f32 %v186, %v245
    %v247 = vpop.f32.mrf.mxu0
    %v248 = vadd.f32 %v186, %v247
    %249 = vdwg.mxu0
    %v250 = vmul.f32 %v246, 0.01
    %v251 = vmul.f32 %v248, 0.01
    %v252 = vmax.f32 %v246, %v250
    %v253 = vmax.f32 %v248, %v251
    %v254 = vpack.c.bf16 %v253, %v252
    %v255 = vld [vmem:[#allocation6] sm:$0xf]
    %v256 = vld [vmem:[#allocation6 + $0x4] sm:$0xf]
    %v257 = vld [vmem:[#allocation6 + $0x8] sm:$0xf]
    %v258 = vld [vmem:[#allocation6 + $0xc] sm:$0xf]
    %v259 = vld [vmem:[#allocation6 + $0x10] sm:$0xf]
    %v260 = vld [vmem:[#allocation6 + $0x14] sm:$0xf]
    %v261 = vld [vmem:[#allocation6 + $0x18] sm:$0xf]
    %v262 = vld [vmem:[#allocation6 + $0x1c] sm:$0xf]
    %v263 = vld [vmem:[#allocation6 + $0x20] sm:$0xf]
    %v264 = vld [vmem:[#allocation6 + $0x24] sm:$0xf]
    %v265 = vld [vmem:[#allocation6 + $0x28] sm:$0xf]
    %v266 = vld [vmem:[#allocation6 + $0x2c] sm:$0xf]
    %v267 = vld [vmem:[#allocation6 + $0x30] sm:$0xf]
    %v268 = vld [vmem:[#allocation6 + $0x34] sm:$0xf]
    %v269 = vld [vmem:[#allocation6 + $0x38] sm:$0xf]
    %v270 = vld [vmem:[#allocation6 + $0x3c] sm:$0xf]
    %v271 = vld [vmem:[%s6] sm:$0x1]
    %v273 = vperm.slane %v271, 0
    %v291 = vunpack.c.l.b16 %v255
    %v292 = vunpack.c.l.b16 %v256
    %v293 = vunpack.c.l.b16 %v257
    %v294 = vunpack.c.l.b16 %v258
    %v295 = vunpack.c.l.b16 %v259
    %v296 = vunpack.c.l.b16 %v260
    %v297 = vunpack.c.l.b16 %v261
    %v298 = vunpack.c.l.b16 %v262
    %v299 = vunpack.c.l.b16 %v263
    %v300 = vunpack.c.l.b16 %v264
    %v301 = vunpack.c.l.b16 %v265
    %v302 = vunpack.c.l.b16 %v266
    %v303 = vunpack.c.l.b16 %v267
    %v304 = vunpack.c.l.b16 %v268
    %v305 = vunpack.c.l.b16 %v269
    %v306 = vunpack.c.l.b16 %v270
    %v307 = vpack.c.b16 %v292, %v291
    %v308 = vpack.c.b16 %v294, %v293
    %v309 = vpack.c.b16 %v296, %v295
    %v310 = vpack.c.b16 %v298, %v297
    %v311 = vpack.c.b16 %v300, %v299
    %v312 = vpack.c.b16 %v302, %v301
    %v313 = vpack.c.b16 %v304, %v303
    %v314 = vpack.c.b16 %v306, %v305
    %323 = vmatpush.bf16.msra.mxu0 %v314
    %324 = vmatpush.bf16.msra.mxu0 %v313
    %325 = vmatpush.bf16.msra.mxu0 %v312
    %326 = vmatpush.bf16.msra.mxu0 %v311
    %327 = vmatpush.bf16.msra.mxu0 %v310
    %328 = vmatpush.bf16.msra.mxu0 %v309
    %329 = vmatpush.bf16.msra.mxu0 %v308
    %330 = vmatpush.bf16.msra.mxu0 %v307
    %331 = vmatmul.bf16.gmra.mxu0 %v254
    %v332 = vpop.f32.mrf.mxu0
    %v333 = vadd.f32 %v273, %v332
    %v334 = vpop.f32.mrf.mxu0
    %v335 = vadd.f32 %v273, %v334
    %336 = vdwg.mxu0
    %337 = vst [vmem:[%s7] sm:$0xff] %v333
    %338 = vst [vmem:[%s7 + $0x8] sm:$0xff] %v335
    // Predicated region
    $region42: #{mlp_forward_padded.1} parent=1 // pred_check
      _
    $region43: #{mlp_forward_padded.1} parent=1 // pred_check_branch
      %340 = sbr.rel (0) target = $region45
    $region44: #{mlp_forward_padded.1} parent=1 // pred_region
      _
    $region45: #{mlp_forward_padded.1} parent=1 // pred_fallthru
      _
    // Predicated region
    $region46: #{mlp_forward_padded.1} parent=1 // pred_check
      _
    $region47: #{mlp_forward_padded.1} parent=1 // pred_check_branch
      %342 = sbr.rel (0) target = $region49
    $region48: #{mlp_forward_padded.1} parent=1 // pred_region
      _
    $region49: #{mlp_forward_padded.1} parent=1 // pred_fallthru
      _
    %343 = vsyncpa [#allocation3], 1
    %344 = vsyncpa [#allocation5], 1

</llo_original>
